<compile_context>
chip_gen: v5e
topology: v5e:2x2
jax: 0.10.0
libtpu: 0.0.40
codegen_flags: <defaults>
</compile_context>

<pallas_src>
import jax
import jax.numpy as jnp
from jax.experimental import pallas as pl
from jax.experimental.pallas import tpu as pltpu

BN_EPS = 1e-5


def _residual_kernel(x_ref, w_ref, gb_ref, y_ref):
    # x_ref:  (N, I)    VMEM-resident (constant index map)
    # w_ref:  (TO, I)   feature tile j of the torch-layout (O_pad, I) weight (streamed)
    # gb_ref: (2, TO)   packed [gamma; beta] tile j, f32 (streamed, tiny)
    # y_ref:  (N, TO)   streamed output tile = relu(bn(x @ w.T)) columns [j*TO, (j+1)*TO)
    x = x_ref[...]
    w = w_ref[...]
    if x.dtype != w.dtype:
        # e.g. bf16 weight streaming: cast the small activation tile to the weight dtype;
        # the MXU still accumulates in f32 via preferred_element_type.
        x = x.astype(w.dtype)

    # Linear (bias cancelled by training-mode BN mean subtraction).  Torch layout (O, I):
    # contract x axis 1 with w axis 1 -> (N, TO).  No wrapper-side transpose needed.
    h = jax.lax.dot_general(
        x, w, dimension_numbers=(((1,), (1,)), ((), ())),
        preferred_element_type=jnp.float32,
    )

    # Two-pass batch statistics in f32 (centered variance avoids catastrophic cancellation).
    inv_n = 1.0 / x_ref.shape[0]
    mean = jnp.sum(h, axis=0, keepdims=True) * inv_n            # (1, TO)
    c = h - mean
    var = jnp.sum(c * c, axis=0, keepdims=True) * inv_n         # biased var (training mode)
    inv_std = jax.lax.rsqrt(var + BN_EPS)

    gb = gb_ref[...]                                            # (2, TO) f32
    gamma = gb[0:1, :]
    beta = gb[1:2, :]
    y = jnp.maximum(c * (gamma * inv_std) + beta, 0.0)
    y_ref[...] = y.astype(y_ref.dtype)


def _round_up(v, m):
    return (v + m - 1) // m * m


def _vmem_budget_bytes():
    phys = 64 * 1024 * 1024  # conservative default: v7x per-TensorCore VMEM
    try:
        cap = getattr(pltpu.get_tpu_info(), "vmem_capacity_bytes", None)
        if cap:
            phys = int(cap)
    except Exception:
        pass
    # Leave headroom for compiler-internal scratch / semaphores:
    # v7x (64 MiB) -> 56 MiB budget; v5e/v6e (128 MiB) -> 112 MiB budget.
    return phys - max(8 * 1024 * 1024, phys // 8)


def _choose_feature_tile(o_pad, n, i, x_item, w_item, budget):
    # Default BlockSpec pipelining allocates 2 buffers per spec -- including the
    # constant-index-map "resident" x block -- so count everything twice.
    def need(to):
        return (2 * n * i * x_item          # resident x block
                + 2 * to * i * w_item       # streamed (TO, I) weight tile
                + 2 * 2 * to * 4            # streamed (2, TO) gamma/beta tile (f32)
                + 2 * n * to * x_item)      # streamed (N, TO) output tile
    for cand in (2048, 1024, 512, 256, 128):
        if o_pad % cand == 0 and need(cand) <= budget:
            return cand, need(cand)
    return 128, need(128)


def residual_forward(x, w, b, gamma, beta):
    """Forward of Residual: concat([relu(batchnorm_train(x @ w.T + b)), x], axis=1).

    x: (N, I); w: (O, I) torch Linear weight kept in its native layout (no transpose is
    performed -- pass it in bf16 to halve the dominant HBM weight stream); b/gamma/beta: (O,).
    `b` is accepted for API parity but cancels exactly under training-mode BatchNorm mean
    subtraction, so it is not sent to the kernel.
    """
    del b  # cancelled by training-mode BatchNorm mean subtraction
    x = jnp.asarray(x)
    w = jnp.asarray(w)
    n, i = x.shape
    o = w.shape[0]

    # Lane-dense layout: pad the feature axis to a multiple of 128 so every output store is
    # an unmasked full-lane vst.  Padded weight rows / gamma / beta are zero, so padded
    # columns stay finite (var=0 -> rsqrt(eps), gamma=beta=0 -> y=0) and are sliced off.
    o_pad = _round_up(o, 128)
    if o_pad != o:
        w = jnp.pad(w, ((0, o_pad - o), (0, 0)))
    gb = jnp.zeros((2, o_pad), jnp.float32)
    gb = gb.at[0, :o].set(jnp.asarray(gamma, jnp.float32))
    gb = gb.at[1, :o].set(jnp.asarray(beta, jnp.float32))

    x_item = jnp.dtype(x.dtype).itemsize
    w_item = jnp.dtype(w.dtype).itemsize
    budget = _vmem_budget_bytes()
    to, vmem_need = _choose_feature_tile(o_pad, n, i, x_item, w_item, budget)
    n_tiles = o_pad // to
    vmem_limit = int(min(budget, max(32 * 1024 * 1024, vmem_need + vmem_need // 2)))
    # TODO(synk): add an N-tiled two-pass (stats pass, then normalize pass) variant for
    # batches whose resident (N, I) x block no longer fits the per-TensorCore VMEM budget.

    cost = pl.CostEstimate(
        flops=2 * n * i * o_pad,
        transcendentals=0,
        bytes_accessed=(o_pad * i * w_item      # weight stream (dominant)
                        + n * i * x_item        # x
                        + n * o_pad * x_item    # y
                        + 2 * o_pad * 4),       # gamma/beta
    )

    y = pl.pallas_call(
        _residual_kernel,
        out_shape=jax.ShapeDtypeStruct((n, o_pad), x.dtype),
        grid_spec=pltpu.PrefetchScalarGridSpec(
            num_scalar_prefetch=0,
            grid=(n_tiles,),
            in_specs=[
                pl.BlockSpec((n, i), lambda j: (0, 0)),      # x: VMEM-resident
                pl.BlockSpec((to, i), lambda j: (j, 0)),     # weight tile, torch (O, I) layout
                pl.BlockSpec((2, to), lambda j: (0, j)),     # packed [gamma; beta] tile
            ],
            out_specs=pl.BlockSpec((n, to), lambda j: (0, j)),  # streamed output tile
        ),
        compiler_params=pltpu.CompilerParams(
            # Each feature tile is fully independent (BN stats are per-feature), so the grid
            # axis can shard across TensorCores (v7x megacore) and overlap per-tile writeback.
            dimension_semantics=("parallel",),
            vmem_limit_bytes=vmem_limit,
        ),
        cost_estimate=cost,
    )(x, w, gb)

    if o_pad != o:
        y = y[:, :o]
    # torch.cat([out, input], dim=1): done in the wrapper so the kernel output stays a
    # lane-dense streamed tile (costs N*(O+2I) bytes, negligible vs. the I*O weight stream).
    return jnp.concatenate([y, x], axis=1)


def _reference(x, w, b, gamma, beta):
    h = x @ w.T + b
    mean = h.mean(axis=0, keepdims=True)
    var = h.var(axis=0, keepdims=True)                       # biased, training mode
    y = (h - mean) / jnp.sqrt(var + BN_EPS) * gamma + beta
    return jnp.concatenate([jnp.maximum(y, 0.0), x], axis=1)


if __name__ == "__main__":
    key = jax.random.PRNGKey(0)
    N, I, O = 8, 32, 64       # batch=8, in_features=32, out_features=64

    kx, kw, kb = jax.random.split(key, 3)
    x = jax.random.normal(kx, (N, I), dtype=jnp.float32)
    bound = 1.0 / (I ** 0.5)
    w = jax.random.uniform(kw, (O, I), minval=-bound, maxval=bound, dtype=jnp.float32)
    b = jax.random.uniform(kb, (O,), minval=-bound, maxval=bound, dtype=jnp.float32)
    gamma = jnp.ones((O,), jnp.float32)      # BatchNorm1d default weight
    beta = jnp.zeros((O,), jnp.float32)      # BatchNorm1d default bias

    ref = _reference(x, w, b, gamma, beta)

    # f32 weight path (exact parity with the reference).
    out = jax.block_until_ready(residual_forward(x, w, b, gamma, beta))
    assert out.shape == (N, O + I), out.shape
    assert jnp.allclose(out, ref, atol=1e-4, rtol=1e-4), float(jnp.max(jnp.abs(out - ref)))

    # bf16 weight-streaming path (halves the dominant HBM stream; f32 accumulation/epilogue).
    out_bf16 = jax.block_until_ready(
        residual_forward(x, w.astype(jnp.bfloat16), b, gamma, beta))
    assert out_bf16.shape == (N, O + I), out_bf16.shape
    assert jnp.allclose(out_bf16, ref, atol=1e-1, rtol=1e-1), \
        float(jnp.max(jnp.abs(out_bf16 - ref)))

    print("KERNEL_OK")
</pallas_src>

<mosaic_0001>
module attributes {stable_mosaic.version = 11 : i64} {
  func.func @_residual_kernel(%arg0: i32, %arg1: memref<8x32xf32, #tpu.memory_space<vmem>>, %arg2: memref<128x32xf32, #tpu.memory_space<vmem>>, %arg3: memref<2x128xf32, #tpu.memory_space<vmem>>, %arg4: memref<8x128xf32, #tpu.memory_space<vmem>>) attributes {dimension_semantics = [#tpu.dimension_semantics<parallel>], iteration_bounds = array<i64: 1>, scalar_prefetch = 0 : i64, scratch_operands = 0 : i64, tpu.core_type = #tpu.core_type<tc>, window_params = [{pipeline_mode = #tpu.pipeline_mode<synchronous>, transform_indices = @transform_0, window_bounds = array<i64: 8, 32>}, {transform_indices = @transform_1, window_bounds = array<i64: 128, 32>}, {transform_indices = @transform_2, window_bounds = array<i64: 2, 128>}, {transform_indices = @transform_3, window_bounds = array<i64: 8, 128>}]} {
    %c0 = arith.constant 0 : index
    %c0_0 = arith.constant 0 : index
    %0 = vector.load %arg1[%c0, %c0_0] : memref<8x32xf32, #tpu.memory_space<vmem>>, vector<8x32xf32>
    %c0_1 = arith.constant 0 : index
    %c0_2 = arith.constant 0 : index
    %1 = vector.load %arg2[%c0_1, %c0_2] : memref<128x32xf32, #tpu.memory_space<vmem>>, vector<128x32xf32>
    %cst = arith.constant dense<0.000000e+00> : vector<8x128xf32>
    %2 = tpu.matmul %0, %1, %cst {dimension_numbers = #tpu.dot_dimension_numbers<[1], [1], [0], [0], [0, 0, 1, 0], [], []>} : vector<8x32xf32>, vector<128x32xf32>, vector<8x128xf32> -> vector<8x128xf32>
    %cst_3 = arith.constant dense<0.000000e+00> : vector<128xf32>
    %3 = vector.multi_reduction <add>, %2, %cst_3 [0] : vector<8x128xf32> to vector<128xf32>
    %4 = vector.shape_cast %3 : vector<128xf32> to vector<1x128xf32>
    %cst_4 = arith.constant 1.250000e-01 : f32
    %5 = vector.broadcast %cst_4 : f32 to vector<1x128xf32>
    %6 = arith.mulf %4, %5 : vector<1x128xf32>
    %7 = vector.broadcast %6 : vector<1x128xf32> to vector<8x128xf32>
    %8 = arith.subf %2, %7 : vector<8x128xf32>
    %9 = arith.mulf %8, %8 : vector<8x128xf32>
    %cst_5 = arith.constant dense<0.000000e+00> : vector<128xf32>
    %10 = vector.multi_reduction <add>, %9, %cst_5 [0] : vector<8x128xf32> to vector<128xf32>
    %11 = vector.shape_cast %10 : vector<128xf32> to vector<1x128xf32>
    %cst_6 = arith.constant 1.250000e-01 : f32
    %12 = vector.broadcast %cst_6 : f32 to vector<1x128xf32>
    %13 = arith.mulf %11, %12 : vector<1x128xf32>
    %cst_7 = arith.constant 9.99999974E-6 : f32
    %14 = vector.broadcast %cst_7 : f32 to vector<1x128xf32>
    %15 = arith.addf %13, %14 : vector<1x128xf32>
    %16 = math.rsqrt %15 : vector<1x128xf32>
    %c0_8 = arith.constant 0 : index
    %c0_9 = arith.constant 0 : index
    %17 = vector.load %arg3[%c0_8, %c0_9] : memref<2x128xf32, #tpu.memory_space<vmem>>, vector<2x128xf32>
    %18 = vector.extract_strided_slice %17 {offsets = [0, 0], sizes = [1, 128], strides = [1, 1]} : vector<2x128xf32> to vector<1x128xf32>
    %19 = vector.extract_strided_slice %17 {offsets = [1, 0], sizes = [1, 128], strides = [1, 1]} : vector<2x128xf32> to vector<1x128xf32>
    %20 = arith.mulf %18, %16 : vector<1x128xf32>
    %21 = vector.broadcast %20 : vector<1x128xf32> to vector<8x128xf32>
    %22 = arith.mulf %8, %21 : vector<8x128xf32>
    %23 = vector.broadcast %19 : vector<1x128xf32> to vector<8x128xf32>
    %24 = arith.addf %22, %23 : vector<8x128xf32>
    %cst_10 = arith.constant 0.000000e+00 : f32
    %25 = vector.broadcast %cst_10 : f32 to vector<8x128xf32>
    %26 = arith.maximumf %24, %25 : vector<8x128xf32>
    %c0_11 = arith.constant 0 : index
    %c0_12 = arith.constant 0 : index
    %27 = vector.load %arg4[%c0_11, %c0_12] : memref<8x128xf32, #tpu.memory_space<vmem>>, vector<8x128xf32>
    tpu.vector_store %arg4[%c0_11, %c0_12], %26 {strides = array<i32>} : memref<8x128xf32, #tpu.memory_space<vmem>>, vector<8x128xf32>,
    return
  }
  func.func @transform_0(%arg0: i32) -> (i32, i32) {
    %c0_i32 = arith.constant 0 : i32
    %c0_i32_0 = arith.constant 0 : i32
    %c0_i32_1 = arith.constant 0 : i32
    return %c0_i32, %c0_i32_0 : i32, i32
  }
  func.func @transform_1(%arg0: i32) -> (i32, i32) {
    %c0_i32 = arith.constant 0 : i32
    %c0_i32_0 = arith.constant 0 : i32
    return %arg0, %c0_i32 : i32, i32
  }
  func.func @transform_2(%arg0: i32) -> (i32, i32) {
    %c0_i32 = arith.constant 0 : i32
    %c0_i32_0 = arith.constant 0 : i32
    return %c0_i32, %arg0 : i32, i32
  }
  func.func @transform_3(%arg0: i32) -> (i32, i32) {
    %c0_i32 = arith.constant 0 : i32
    %c0_i32_0 = arith.constant 0 : i32
    return %c0_i32, %arg0 : i32, i32
  }
}

</mosaic_0001>

<llo_original>
// kernel: tpu_custom_call.1
$region0: #{tpu_custom_call.1}
  #allocation0 [shape = 'u32[]', space=smem, size = 0x4, offset = 0x4, fixed_abs, tag = 'smem constant byte address 0x4 - core index']
  #allocation1 [shape = 'u32[72,128]{1,0:T(1,128)}', space=vmem, size = 0x9000, scoped, tag = 'internal scratch']
  %s0 = inlined_call_operand.vmem [shape: f32[8,32], index: 0, kind: input, shape index: {}]
  %s1 = inlined_call_operand.vmem [shape: f32[128,32], index: 1, kind: input, shape index: {}]
  %s2 = inlined_call_operand.vmem [shape: f32[2,128], index: 2, kind: input, shape index: {}]
  %s3 = inlined_call_operand.hbm [shape: f32[8,128], index: 3, kind: output, shape index: {}]
  %s4 = sld [smem:[#allocation0]]
  $region22: #{tpu_custom_call.1} parent=0
    _
  %s6 = ssub.s32 1, %s4
  %s7 = scalar_select 0, %s6, %s4
  $region1: #{tpu_custom_call.1} parent=0
    #allocation2 [shape = 'u8[4096]{0}', space=vmem, size = 0x1000, scoped, tag = 'output window, operand 0, single buffered']
    #allocation3 [shape = 's32[1]{0}', space=sflag, size = 0x4, scoped, tag = 'scoped memory for tpu_custom_call.1']
    %8 = vsyncpa [#allocation3], 0
    // Predicated region
    $region2: #{tpu_custom_call.1} parent=1 // pred_check
      _
    $region3: #{tpu_custom_call.1} parent=1 // pred_check_branch
      %10 = sbr.rel (0) target = $region5
    $region4: #{tpu_custom_call.1} parent=1 // pred_region
      _
    $region5: #{tpu_custom_call.1} parent=1 // pred_fallthru
      _
    // Predicated region
    $region6: #{tpu_custom_call.1} parent=1 // pred_check
      _
    $region7: #{tpu_custom_call.1} parent=1 // pred_check_branch
      %12 = sbr.rel (0) target = $region9
    $region8: #{tpu_custom_call.1} parent=1 // pred_region
      _
    $region9: #{tpu_custom_call.1} parent=1 // pred_fallthru
      _
    // Predicated region
    $region10: #{tpu_custom_call.1} parent=1 // pred_check
      _
    $region11: #{tpu_custom_call.1} parent=1 // pred_check_branch
      %14 = sbr.rel (0) target = $region13
    $region12: #{tpu_custom_call.1} parent=1 // pred_region
      _
    $region13: #{tpu_custom_call.1} parent=1 // pred_fallthru
      _
    %v15 = vld [vmem:[%s0] sm:$0xff]
    %v16 = vld [vmem:[%s1] sm:$0xff]
    %v17 = vld [vmem:[%s1 + $0x8] sm:$0xff]
    %v18 = vld [vmem:[%s1 + $0x10] sm:$0xff]
    %v19 = vld [vmem:[%s1 + $0x18] sm:$0xff]
    %v20 = vld [vmem:[%s1 + $0x20] sm:$0xff]
    %v21 = vld [vmem:[%s1 + $0x28] sm:$0xff]
    %v22 = vld [vmem:[%s1 + $0x30] sm:$0xff]
    %v23 = vld [vmem:[%s1 + $0x38] sm:$0xff]
    %v24 = vld [vmem:[%s1 + $0x40] sm:$0xff]
    %v25 = vld [vmem:[%s1 + $0x48] sm:$0xff]
    %v26 = vld [vmem:[%s1 + $0x50] sm:$0xff]
    %v27 = vld [vmem:[%s1 + $0x58] sm:$0xff]
    %v28 = vld [vmem:[%s1 + $0x60] sm:$0xff]
    %v29 = vld [vmem:[%s1 + $0x68] sm:$0xff]
    %v30 = vld [vmem:[%s1 + $0x70] sm:$0xff]
    %v31 = vld [vmem:[%s1 + $0x78] sm:$0xff]
    %vm32 = vcmask 261120
    %v34 = vsel %vm32, %v15, 0
    %v37 = vsel %vm32, %v16, 0
    %v40 = vsel %vm32, %v17, 0
    %v43 = vsel %vm32, %v18, 0
    %v46 = vsel %vm32, %v19, 0
    %v49 = vsel %vm32, %v20, 0
    %v52 = vsel %vm32, %v21, 0
    %v55 = vsel %vm32, %v22, 0
    %v58 = vsel %vm32, %v23, 0
    %v61 = vsel %vm32, %v24, 0
    %v64 = vsel %vm32, %v25, 0
    %v67 = vsel %vm32, %v26, 0
    %v70 = vsel %vm32, %v27, 0
    %v73 = vsel %vm32, %v28, 0
    %v76 = vsel %vm32, %v29, 0
    %v79 = vsel %vm32, %v30, 0
    %v82 = vsel %vm32, %v31, 0
    %84 = vmatpush.xpose.msra.mxu0 %v82
    %85 = vmatpush.xpose.msra.mxu0 %v79
    %86 = vmatpush.xpose.msra.mxu0 %v76
    %87 = vmatpush.xpose.msra.mxu0 %v73
    %88 = vmatpush.xpose.msra.mxu0 %v70
    %89 = vmatpush.xpose.msra.mxu0 %v67
    %90 = vmatpush.xpose.msra.mxu0 %v64
    %91 = vmatpush.xpose.msra.mxu0 %v61
    %92 = vmatpush.xpose.msra.mxu0 %v58
    %93 = vmatpush.xpose.msra.mxu0 %v55
    %94 = vmatpush.xpose.msra.mxu0 %v52
    %95 = vmatpush.xpose.msra.mxu0 %v49
    %96 = vmatpush.xpose.msra.mxu0 %v46
    %97 = vmatpush.xpose.msra.mxu0 %v43
    %98 = vmatpush.xpose.msra.mxu0 %v40
    %99 = vmatpush.xpose.msra.mxu0 %v37
    %100 = vmatmul.f32.gmra.mxu0 %v34
    %v101 = vpop.f32.mrf.mxu0
    %v102 = vadd.f32 0.0, %v101
    %103 = vdwg.mxu0
    %v104 = vrot.slane %v102, 4
    %v105 = vadd.f32 %v102, %v104
    %v106 = vrot.slane %v105, 2
    %v107 = vadd.f32 %v105, %v106
    %v108 = vrot.slane %v107, 1
    %v109 = vadd.f32 %v107, %v108
    %v110 = vmul.f32 %v109, 0.125
    %v111 = vsub.f32 %v102, %v110
    %v112 = vmul.f32 %v111, %v111
    %v113 = vrot.slane %v112, 4
    %v114 = vadd.f32 %v112, %v113
    %v115 = vrot.slane %v114, 2
    %v116 = vadd.f32 %v114, %v115
    %v117 = vrot.slane %v116, 1
    %v118 = vadd.f32 %v116, %v117
    %v119 = vmul.f32 %v118, 0.125
    %v120 = vadd.f32 %v119, 1e-05
    %v121 = vrsqrt.pop %v120
    %v122 = vmul.f32 %v121, %v120
    %v123 = vmul.f32 %v122, %v121
    %v124 = vmul.f32 0.5, %v123
    %v125 = vsub.f32 1.5, %v124
    %v126 = vmul.f32 %v121, %v125
    %vm127 = vweird.f32 %v120
    %vm128 = vweird.f32 %v121
    %vm129 = vmor %vm127, %vm128
    %v130 = vsel %vm129, %v121, %v126
    %v131 = vld [vmem:[%s2] sm:$0x3]
    %v132 = vmul.f32 %v131, %v130
    %v133 = vperm.slane %v132, 0
    %v134 = vmul.f32 %v111, %v133
    %v135 = vperm.slane %v131, 1
    %v136 = vadd.f32 %v134, %v135
    %v137 = vmax.f32 %v136, 0.0
    %138 = vst [vmem:[#allocation2] sm:$0xff] %v137
    // Predicated region
    $region14: #{tpu_custom_call.1} parent=1 // pred_check
      _
    $region15: #{tpu_custom_call.1} parent=1 // pred_check_branch
      %140 = sbr.rel (0) target = $region17
    $region16: #{tpu_custom_call.1} parent=1 // pred_region
      %142 = vsyncadd [#allocation3], 0
      %s144 = sshll.u32 [#allocation2], 4
      %s145 = int_to_ptr.vmem [resolvable:$true] %s144
      %s146 = sshll.u32 %s3, 4
      %s147 = int_to_ptr.hbm [resolvable:$true] %s146
      %149 = dma.vmem_to_hbm [thread:$0]  %s145, 128, %s147, [#allocation3]
    $region17: #{tpu_custom_call.1} parent=1 // pred_fallthru
      _
    // Predicated region
    $region18: #{tpu_custom_call.1} parent=1 // pred_check
      _
    $region19: #{tpu_custom_call.1} parent=1 // pred_check_branch
      %151 = sbr.rel (0) target = $region21
    $region20: #{tpu_custom_call.1} parent=1 // pred_region
      %153 = dma.done [#allocation3], 128
    $region21: #{tpu_custom_call.1} parent=1 // pred_fallthru
      _
    %154 = vsyncpa [#allocation3], 1

</llo_original>
